<compile_context>
chip_gen: v7x
topology: tpu7x:2x2x1
jax: 0.10.0
libtpu: 0.0.40
codegen_flags: <defaults>
</compile_context>

<pallas_src>
import jax
import jax.numpy as jnp
import numpy as np
from jax.experimental import pallas as pl
from jax.experimental.pallas import tpu as pltpu

_BN_EPS = 1e-5
# Contract the feature axis of both operands: (8, D) . (TN, D) -> (8, TN).
_PROJ_DIMS = (((1,), (1,)), ((), ()))


def _round_up(v, m):
    return ((v + m - 1) // m) * m


def _vmem_limit_bytes():
    phys = 128 * 1024 * 1024
    try:
        info = pltpu.get_tpu_info()
        phys = int(getattr(info, "vmem_capacity_bytes", phys))
    except Exception:
        pass
    # Leave headroom for Mosaic internal scratch; v7x only has 64 MiB physical.
    return max(32 * 1024 * 1024, min((phys * 3) // 4, 96 * 1024 * 1024))


# --------------------------------------------------------------------------- #
# Single-pass kernel: whole problem resident in VMEM (one HBM read of x / y).  #
# --------------------------------------------------------------------------- #
def _ufdm_small_kernel(x_ref, y_ref, a_ref, b_ref, gx_ref, bx_ref, gy_ref, by_ref,
                       out_ref):
    n = x_ref.shape[0]
    inv_n = 1.0 / float(n)

    x = x_ref[...].astype(jnp.float32)          # (N, Dx)
    y = y_ref[...].astype(jnp.float32)          # (N, Dy)
    a = a_ref[...].astype(jnp.float32)          # (1, Dx)
    b = b_ref[...].astype(jnp.float32)          # (1, Dy)
    gx = gx_ref[...].astype(jnp.float32)
    bx = bx_ref[...].astype(jnp.float32)
    gy = gy_ref[...].astype(jnp.float32)
    by = by_ref[...].astype(jnp.float32)

    # BatchNorm training-mode statistics (biased variance, computed centered).
    mx = jnp.sum(x, axis=0, keepdims=True) * inv_n
    xc = x - mx
    vx = jnp.sum(xc * xc, axis=0, keepdims=True) * inv_n
    my = jnp.sum(y, axis=0, keepdims=True) * inv_n
    yc = y - my
    vy = jnp.sum(yc * yc, axis=0, keepdims=True) * inv_n

    # Fold BN + affine + a/||a|| projection into one weight row + scalar offset.
    inv_na = jax.lax.rsqrt(jnp.sum(a * a, keepdims=True))      # (1, 1)
    inv_nb = jax.lax.rsqrt(jnp.sum(b * b, keepdims=True))
    sclx = gx * jax.lax.rsqrt(vx + _BN_EPS)
    scly = gy * jax.lax.rsqrt(vy + _BN_EPS)
    wx = sclx * a * inv_na                                      # (1, Dx)
    wy = scly * b * inv_nb
    cx = jnp.sum((bx - mx * sclx) * a, keepdims=True) * inv_na  # (1, 1)
    cy = jnp.sum((by - my * scly) * b, keepdims=True) * inv_nb

    # Lane-dense per-sample projections via the MXU (batch ends up on lanes).
    wx8 = jnp.broadcast_to(wx, (8, wx.shape[1]))
    wy8 = jnp.broadcast_to(wy, (8, wy.shape[1]))
    xa = jax.lax.dot_general(wx8, x, _PROJ_DIMS,
                             preferred_element_type=jnp.float32)[0:1, :] + cx
    yb = jax.lax.dot_general(wy8, y, _PROJ_DIMS,
                             preferred_element_type=jnp.float32)[0:1, :] + cy

    cxa = jnp.cos(xa)
    sxa = jnp.sin(xa)
    cyb = jnp.cos(yb)
    syb = jnp.sin(yb)

    e_cx = jnp.sum(cxa, keepdims=True) * inv_n
    e_sx = jnp.sum(sxa, keepdims=True) * inv_n
    e_cy = jnp.sum(cyb, keepdims=True) * inv_n
    e_sy = jnp.sum(syb, keepdims=True) * inv_n
    # Angle addition: cos/sin of (xa+yb) from cos/sin of xa and yb.
    e_cz = jnp.sum(cxa * cyb - sxa * syb, keepdims=True) * inv_n
    e_sz = jnp.sum(sxa * cyb + cxa * syb, keepdims=True) * inv_n

    re = e_cz - (e_cx * e_cy - e_sx * e_sy)
    im = e_sz - (e_cx * e_sy + e_sx * e_cy)
    out_ref[...] = jnp.sqrt(re * re + im * im).astype(out_ref.dtype)


# --------------------------------------------------------------------------- #
# Streaming path, pass A: per-tile feature moments (parallel over batch tiles) #
# --------------------------------------------------------------------------- #
def _make_moments_kernel(n_rows, tile_n, needs_mask):
    def kernel(x_ref, y_ref, sx_ref, sxx_ref, sy_ref, syy_ref):
        x = x_ref[...].astype(jnp.float32)      # (TN, Dx)
        y = y_ref[...].astype(jnp.float32)      # (TN, Dy)

        def emit(xv, yv):
            # Sublane (axis-0) reductions land lane-dense (1, D) partials.
            sx_ref[0] = jnp.sum(xv, axis=0, keepdims=True)
            sxx_ref[0] = jnp.sum(xv * xv, axis=0, keepdims=True)
            sy_ref[0] = jnp.sum(yv, axis=0, keepdims=True)
            syy_ref[0] = jnp.sum(yv * yv, axis=0, keepdims=True)

        if needs_mask:
            t = pl.program_id(0)
            last = pl.num_programs(0) - 1

            @pl.when(t < last)
            def _full():
                emit(x, y)

            @pl.when(t == last)
            def _masked():
                row = jax.lax.broadcasted_iota(jnp.int32, (tile_n, 1), 0)
                valid = (t * tile_n + row) < n_rows
                emit(jnp.where(valid, x, 0.0), jnp.where(valid, y, 0.0))
        else:
            emit(x, y)

    return kernel


# --------------------------------------------------------------------------- #
# Streaming path, pass B: characteristic-function partial sums per tile        #
# --------------------------------------------------------------------------- #
def _make_charfn_kernel(n_rows, tile_n, needs_mask):
    def kernel(x_ref, y_ref, wx_ref, wy_ref, cx_ref, cy_ref,
               scx_ref, ssx_ref, scy_ref, ssy_ref, scz_ref, ssz_ref):
        x = x_ref[...].astype(jnp.float32)      # (TN, Dx)
        y = y_ref[...].astype(jnp.float32)      # (TN, Dy)

        # Lane-dense per-sample projections via the MXU; BN + affine + a/||a||
        # are already folded into wx/wy (per-feature) and cx/cy (scalar).
        xa = jax.lax.dot_general(wx_ref[...], x, _PROJ_DIMS,
                                 preferred_element_type=jnp.float32)[0:1, :] + cx_ref[...]
        yb = jax.lax.dot_general(wy_ref[...], y, _PROJ_DIMS,
                                 preferred_element_type=jnp.float32)[0:1, :] + cy_ref[...]

        cxa = jnp.cos(xa)
        sxa = jnp.sin(xa)
        cyb = jnp.cos(yb)
        syb = jnp.sin(yb)

        def emit(ca, sa, cb, sb):
            scx_ref[0] = jnp.sum(ca, keepdims=True)
            ssx_ref[0] = jnp.sum(sa, keepdims=True)
            scy_ref[0] = jnp.sum(cb, keepdims=True)
            ssy_ref[0] = jnp.sum(sb, keepdims=True)
            # Angle addition: cos/sin of (xa+yb) without extra transcendentals.
            scz_ref[0] = jnp.sum(ca * cb - sa * sb, keepdims=True)
            ssz_ref[0] = jnp.sum(sa * cb + ca * sb, keepdims=True)

        if needs_mask:
            t = pl.program_id(0)
            last = pl.num_programs(0) - 1

            @pl.when(t < last)
            def _full():
                emit(cxa, sxa, cyb, syb)

            @pl.when(t == last)
            def _masked():
                col = jax.lax.broadcasted_iota(jnp.int32, (1, tile_n), 1)
                valid = (t * tile_n + col) < n_rows
                zero = jnp.zeros_like(cxa)
                emit(jnp.where(valid, cxa, zero), jnp.where(valid, sxa, zero),
                     jnp.where(valid, cyb, zero), jnp.where(valid, syb, zero))
        else:
            emit(cxa, sxa, cyb, syb)

    return kernel


def ufdm_forward(x, y, a, b, gamma_x, beta_x, gamma_y, beta_y, *, tile_n=None):
    """UFDM forward (update=False, normalize=True). Returns a (1, 1) float32."""
    x = jnp.asarray(x)
    y = jnp.asarray(y)
    n, dim_x = x.shape
    n2, dim_y = y.shape
    assert n == n2, "x and y must share the batch dimension"

    vmem_limit = _vmem_limit_bytes()

    a32 = jnp.asarray(a, jnp.float32).reshape(dim_x)
    b32 = jnp.asarray(b, jnp.float32).reshape(dim_y)
    gx32 = jnp.asarray(gamma_x, jnp.float32).reshape(dim_x)
    bx32 = jnp.asarray(beta_x, jnp.float32).reshape(dim_x)
    gy32 = jnp.asarray(gamma_y, jnp.float32).reshape(dim_y)
    by32 = jnp.asarray(beta_y, jnp.float32).reshape(dim_y)

    padded_row_f32 = (_round_up(dim_x, 128) + _round_up(dim_y, 128)) * 4
    fits_small = n * padded_row_f32 <= min(vmem_limit // 8, 6 * 1024 * 1024)

    if tile_n is None and fits_small:
        # Whole problem resident in VMEM: single kernel, single HBM read of x/y.
        return pl.pallas_call(
            _ufdm_small_kernel,
            out_shape=jax.ShapeDtypeStruct((1, 1), jnp.float32),
            compiler_params=pltpu.CompilerParams(vmem_limit_bytes=vmem_limit),
        )(x, y,
          a32.reshape(1, dim_x), b32.reshape(1, dim_y),
          gx32.reshape(1, dim_x), bx32.reshape(1, dim_x),
          gy32.reshape(1, dim_y), by32.reshape(1, dim_y))

    # ------------------------------ streaming path ------------------------- #
    itemsize = max(jnp.dtype(x.dtype).itemsize, jnp.dtype(y.dtype).itemsize)
    if tile_n is None:
        # 2 pipeline buffers per streamed input + ~2 f32-sized in-kernel temps,
        # with the feature dim lane-padded to 128 for the VMEM footprint.
        per_row = (_round_up(dim_x, 128) + _round_up(dim_y, 128)) * (2 * itemsize + 8)
        budget = min(12 * 1024 * 1024, vmem_limit // 3)
        tile_n = max(8, budget // max(per_row, 1))
    tile_n = int(min(tile_n, n))
    if tile_n < n:
        q = 128 if tile_n >= 128 else 8
        tile_n = max(8, (tile_n // q) * q)
    num_tiles = pl.cdiv(n, tile_n)
    needs_mask = (n % tile_n) != 0
    inv_n = 1.0 / float(n)

    cparams = pltpu.CompilerParams(dimension_semantics=("parallel",),
                                   vmem_limit_bytes=vmem_limit)

    # Pass A: per-tile feature moments. Per-tile outputs (no shared scratch)
    # keep tiles independent so the grid axis can split across TensorCores.
    sx, sxx, sy, syy = pl.pallas_call(
        _make_moments_kernel(n, tile_n, needs_mask),
        out_shape=(
            jax.ShapeDtypeStruct((num_tiles, 1, dim_x), jnp.float32),
            jax.ShapeDtypeStruct((num_tiles, 1, dim_x), jnp.float32),
            jax.ShapeDtypeStruct((num_tiles, 1, dim_y), jnp.float32),
            jax.ShapeDtypeStruct((num_tiles, 1, dim_y), jnp.float32),
        ),
        grid=(num_tiles,),
        in_specs=[
            pl.BlockSpec((tile_n, dim_x), lambda t: (t, 0)),
            pl.BlockSpec((tile_n, dim_y), lambda t: (t, 0)),
        ],
        out_specs=(
            pl.BlockSpec((1, 1, dim_x), lambda t: (t, 0, 0)),
            pl.BlockSpec((1, 1, dim_x), lambda t: (t, 0, 0)),
            pl.BlockSpec((1, 1, dim_y), lambda t: (t, 0, 0)),
            pl.BlockSpec((1, 1, dim_y), lambda t: (t, 0, 0)),
        ),
        compiler_params=cparams,
    )(x, y)

    # Tiny JAX glue: combine tile partials and fold BN + affine + projection.
    mean_x = jnp.sum(sx, axis=0).reshape(dim_x) * inv_n
    mean_y = jnp.sum(sy, axis=0).reshape(dim_y) * inv_n
    # TODO(synk): E[x^2]-E[x]^2 can cancel for |mean| >> std; a Welford/shifted
    # accumulation in pass A would be more robust for such inputs.
    var_x = jnp.maximum(jnp.sum(sxx, axis=0).reshape(dim_x) * inv_n - mean_x * mean_x, 0.0)
    var_y = jnp.maximum(jnp.sum(syy, axis=0).reshape(dim_y) * inv_n - mean_y * mean_y, 0.0)

    inv_na = jax.lax.rsqrt(jnp.sum(a32 * a32))
    inv_nb = jax.lax.rsqrt(jnp.sum(b32 * b32))
    sclx = gx32 * jax.lax.rsqrt(var_x + _BN_EPS)
    scly = gy32 * jax.lax.rsqrt(var_y + _BN_EPS)
    wx8 = jnp.broadcast_to((sclx * a32 * inv_na)[None, :], (8, dim_x))
    wy8 = jnp.broadcast_to((scly * b32 * inv_nb)[None, :], (8, dim_y))
    cx11 = (jnp.sum((bx32 - mean_x * sclx) * a32) * inv_na).reshape(1, 1)
    cy11 = (jnp.sum((by32 - mean_y * scly) * b32) * inv_nb).reshape(1, 1)

    # Pass B: characteristic-function partial sums per tile.
    scx, ssx, scy, ssy, scz, ssz = pl.pallas_call(
        _make_charfn_kernel(n, tile_n, needs_mask),
        out_shape=tuple(jax.ShapeDtypeStruct((num_tiles, 1, 1), jnp.float32)
                        for _ in range(6)),
        grid=(num_tiles,),
        in_specs=[
            pl.BlockSpec((tile_n, dim_x), lambda t: (t, 0)),
            pl.BlockSpec((tile_n, dim_y), lambda t: (t, 0)),
            pl.BlockSpec((8, dim_x), lambda t: (0, 0)),
            pl.BlockSpec((8, dim_y), lambda t: (0, 0)),
            pl.BlockSpec((1, 1), lambda t: (0, 0)),
            pl.BlockSpec((1, 1), lambda t: (0, 0)),
        ],
        out_specs=tuple(pl.BlockSpec((1, 1, 1), lambda t: (t, 0, 0))
                        for _ in range(6)),
        compiler_params=cparams,
    )(x, y, wx8, wy8, cx11, cy11)

    e_cx = jnp.sum(scx) * inv_n
    e_sx = jnp.sum(ssx) * inv_n
    e_cy = jnp.sum(scy) * inv_n
    e_sy = jnp.sum(ssy) * inv_n
    e_cz = jnp.sum(scz) * inv_n
    e_sz = jnp.sum(ssz) * inv_n
    re = e_cz - (e_cx * e_cy - e_sx * e_sy)
    im = e_sz - (e_cx * e_sy + e_sx * e_cy)
    return jnp.sqrt(re * re + im * im).reshape(1, 1)


def _reference(x, y, a, b, gx, bx, gy, by):
    x = jnp.asarray(x, jnp.float32)
    y = jnp.asarray(y, jnp.float32)
    xn = (x - x.mean(0)) / jnp.sqrt(x.var(0) + _BN_EPS) * gx + bx
    yn = (y - y.mean(0)) / jnp.sqrt(y.var(0) + _BN_EPS) * gy + by
    xa = jnp.sum(xn * (a / jnp.linalg.norm(a)), axis=1)
    yb = jnp.sum(yn * (b / jnp.linalg.norm(b)), axis=1)
    f1 = (jnp.mean(jnp.exp(1j * (xa + yb)))
          - jnp.mean(jnp.exp(1j * xa)) * jnp.mean(jnp.exp(1j * yb)))
    return jnp.abs(f1)


if __name__ == "__main__":
    key = jax.random.PRNGKey(0)

    def run_case(subkey, n, dim_x, dim_y, tile_n=None, random_affine=False):
        kx, ky, ka, kb, kg1, kb1, kg2, kb2 = jax.random.split(subkey, 8)
        x = jax.random.normal(kx, (n, dim_x), dtype=jnp.float32)
        y = jax.random.normal(ky, (n, dim_y), dtype=jnp.float32)
        # a, b ~ Uniform[0,1) (init_scale_shift=[1, 0]).
        a = jax.random.uniform(ka, (dim_x,), dtype=jnp.float32)
        b = jax.random.uniform(kb, (dim_y,), dtype=jnp.float32)
        if random_affine:
            gx = 0.5 + jax.random.uniform(kg1, (dim_x,), dtype=jnp.float32)
            bx = 0.1 * jax.random.normal(kb1, (dim_x,), dtype=jnp.float32)
            gy = 0.5 + jax.random.uniform(kg2, (dim_y,), dtype=jnp.float32)
            by = 0.1 * jax.random.normal(kb2, (dim_y,), dtype=jnp.float32)
        else:
            # BatchNorm1d affine params at init: gamma=1, beta=0.
            gx = jnp.ones((dim_x,), jnp.float32)
            bx = jnp.zeros((dim_x,), jnp.float32)
            gy = jnp.ones((dim_y,), jnp.float32)
            by = jnp.zeros((dim_y,), jnp.float32)

        out = jax.block_until_ready(
            ufdm_forward(x, y, a, b, gx, bx, gy, by, tile_n=tile_n))
        ref = jax.block_until_ready(_reference(x, y, a, b, gx, bx, gy, by))
        ok = np.allclose(np.asarray(out)[0, 0], np.asarray(ref),
                         rtol=1e-3, atol=1e-4)
        assert ok, (n, dim_x, dim_y, np.asarray(out), np.asarray(ref))

    k1, k2, k3 = jax.random.split(key, 3)
    # Default-config sized case -> in-VMEM single-pass kernel.
    run_case(k1, n=8, dim_x=32, dim_y=32)
    # Streaming two-kernel path, even tile division.
    run_case(k2, n=384, dim_x=16, dim_y=24, tile_n=128, random_affine=True)
    # Streaming path with a partial (masked) last batch tile.
    run_case(k3, n=200, dim_x=16, dim_y=24, tile_n=128, random_affine=True)

    print("KERNEL_OK")
</pallas_src>

<mosaic_0001>
module attributes {stable_mosaic.version = 11 : i64} {
  func.func @_ufdm_small_kernel(%arg0: memref<8x32xf32, #tpu.memory_space<vmem>>, %arg1: memref<8x32xf32, #tpu.memory_space<vmem>>, %arg2: memref<1x32xf32, #tpu.memory_space<vmem>>, %arg3: memref<1x32xf32, #tpu.memory_space<vmem>>, %arg4: memref<1x32xf32, #tpu.memory_space<vmem>>, %arg5: memref<1x32xf32, #tpu.memory_space<vmem>>, %arg6: memref<1x32xf32, #tpu.memory_space<vmem>>, %arg7: memref<1x32xf32, #tpu.memory_space<vmem>>, %arg8: memref<1x1xf32, #tpu.memory_space<vmem>>) attributes {dimension_semantics = [], scalar_prefetch = 0 : i64, scratch_operands = 0 : i64, tpu.core_type = #tpu.core_type<tc>} {
    %c0 = arith.constant 0 : index
    %c0_0 = arith.constant 0 : index
    %0 = vector.load %arg0[%c0, %c0_0] : memref<8x32xf32, #tpu.memory_space<vmem>>, vector<8x32xf32>
    %c0_1 = arith.constant 0 : index
    %c0_2 = arith.constant 0 : index
    %1 = vector.load %arg1[%c0_1, %c0_2] : memref<8x32xf32, #tpu.memory_space<vmem>>, vector<8x32xf32>
    %c0_3 = arith.constant 0 : index
    %c0_4 = arith.constant 0 : index
    %2 = vector.load %arg2[%c0_3, %c0_4] : memref<1x32xf32, #tpu.memory_space<vmem>>, vector<1x32xf32>
    %c0_5 = arith.constant 0 : index
    %c0_6 = arith.constant 0 : index
    %3 = vector.load %arg3[%c0_5, %c0_6] : memref<1x32xf32, #tpu.memory_space<vmem>>, vector<1x32xf32>
    %c0_7 = arith.constant 0 : index
    %c0_8 = arith.constant 0 : index
    %4 = vector.load %arg4[%c0_7, %c0_8] : memref<1x32xf32, #tpu.memory_space<vmem>>, vector<1x32xf32>
    %c0_9 = arith.constant 0 : index
    %c0_10 = arith.constant 0 : index
    %5 = vector.load %arg5[%c0_9, %c0_10] : memref<1x32xf32, #tpu.memory_space<vmem>>, vector<1x32xf32>
    %c0_11 = arith.constant 0 : index
    %c0_12 = arith.constant 0 : index
    %6 = vector.load %arg6[%c0_11, %c0_12] : memref<1x32xf32, #tpu.memory_space<vmem>>, vector<1x32xf32>
    %c0_13 = arith.constant 0 : index
    %c0_14 = arith.constant 0 : index
    %7 = vector.load %arg7[%c0_13, %c0_14] : memref<1x32xf32, #tpu.memory_space<vmem>>, vector<1x32xf32>
    %cst = arith.constant dense<0.000000e+00> : vector<32xf32>
    %8 = vector.multi_reduction <add>, %0, %cst [0] : vector<8x32xf32> to vector<32xf32>
    %9 = vector.shape_cast %8 : vector<32xf32> to vector<1x32xf32>
    %cst_15 = arith.constant 1.250000e-01 : f32
    %10 = vector.broadcast %cst_15 : f32 to vector<1x32xf32>
    %11 = arith.mulf %9, %10 : vector<1x32xf32>
    %12 = vector.broadcast %11 : vector<1x32xf32> to vector<8x32xf32>
    %13 = arith.subf %0, %12 : vector<8x32xf32>
    %14 = arith.mulf %13, %13 : vector<8x32xf32>
    %cst_16 = arith.constant dense<0.000000e+00> : vector<32xf32>
    %15 = vector.multi_reduction <add>, %14, %cst_16 [0] : vector<8x32xf32> to vector<32xf32>
    %16 = vector.shape_cast %15 : vector<32xf32> to vector<1x32xf32>
    %cst_17 = arith.constant 1.250000e-01 : f32
    %17 = vector.broadcast %cst_17 : f32 to vector<1x32xf32>
    %18 = arith.mulf %16, %17 : vector<1x32xf32>
    %cst_18 = arith.constant dense<0.000000e+00> : vector<32xf32>
    %19 = vector.multi_reduction <add>, %1, %cst_18 [0] : vector<8x32xf32> to vector<32xf32>
    %20 = vector.shape_cast %19 : vector<32xf32> to vector<1x32xf32>
    %cst_19 = arith.constant 1.250000e-01 : f32
    %21 = vector.broadcast %cst_19 : f32 to vector<1x32xf32>
    %22 = arith.mulf %20, %21 : vector<1x32xf32>
    %23 = vector.broadcast %22 : vector<1x32xf32> to vector<8x32xf32>
    %24 = arith.subf %1, %23 : vector<8x32xf32>
    %25 = arith.mulf %24, %24 : vector<8x32xf32>
    %cst_20 = arith.constant dense<0.000000e+00> : vector<32xf32>
    %26 = vector.multi_reduction <add>, %25, %cst_20 [0] : vector<8x32xf32> to vector<32xf32>
    %27 = vector.shape_cast %26 : vector<32xf32> to vector<1x32xf32>
    %cst_21 = arith.constant 1.250000e-01 : f32
    %28 = vector.broadcast %cst_21 : f32 to vector<1x32xf32>
    %29 = arith.mulf %27, %28 : vector<1x32xf32>
    %30 = arith.mulf %2, %2 : vector<1x32xf32>
    %31 = vector.shape_cast %30 : vector<1x32xf32> to vector<1x1x32xf32>
    %cst_22 = arith.constant dense<0.000000e+00> : vector<1xf32>
    %32 = vector.multi_reduction <add>, %31, %cst_22 [1, 2] : vector<1x1x32xf32> to vector<1xf32>
    %33 = vector.shape_cast %32 : vector<1xf32> to vector<1x1x1xf32>
    %34 = vector.extract %33[0, 0, 0] : f32 from vector<1x1x1xf32>
    %35 = vector.broadcast %34 : f32 to vector<1x1xf32>
    %36 = math.rsqrt %35 : vector<1x1xf32>
    %37 = arith.mulf %3, %3 : vector<1x32xf32>
    %38 = vector.shape_cast %37 : vector<1x32xf32> to vector<1x1x32xf32>
    %cst_23 = arith.constant dense<0.000000e+00> : vector<1xf32>
    %39 = vector.multi_reduction <add>, %38, %cst_23 [1, 2] : vector<1x1x32xf32> to vector<1xf32>
    %40 = vector.shape_cast %39 : vector<1xf32> to vector<1x1x1xf32>
    %41 = vector.extract %40[0, 0, 0] : f32 from vector<1x1x1xf32>
    %42 = vector.broadcast %41 : f32 to vector<1x1xf32>
    %43 = math.rsqrt %42 : vector<1x1xf32>
    %cst_24 = arith.constant 9.99999974E-6 : f32
    %44 = vector.broadcast %cst_24 : f32 to vector<1x32xf32>
    %45 = arith.addf %18, %44 : vector<1x32xf32>
    %46 = math.rsqrt %45 : vector<1x32xf32>
    %47 = arith.mulf %4, %46 : vector<1x32xf32>
    %cst_25 = arith.constant 9.99999974E-6 : f32
    %48 = vector.broadcast %cst_25 : f32 to vector<1x32xf32>
    %49 = arith.addf %29, %48 : vector<1x32xf32>
    %50 = math.rsqrt %49 : vector<1x32xf32>
    %51 = arith.mulf %6, %50 : vector<1x32xf32>
    %52 = arith.mulf %47, %2 : vector<1x32xf32>
    %53 = vector.broadcast %36 : vector<1x1xf32> to vector<1x32xf32>
    %54 = arith.mulf %52, %53 : vector<1x32xf32>
    %55 = arith.mulf %51, %3 : vector<1x32xf32>
    %56 = vector.broadcast %43 : vector<1x1xf32> to vector<1x32xf32>
    %57 = arith.mulf %55, %56 : vector<1x32xf32>
    %58 = arith.mulf %11, %47 : vector<1x32xf32>
    %59 = arith.subf %5, %58 : vector<1x32xf32>
    %60 = arith.mulf %59, %2 : vector<1x32xf32>
    %61 = vector.shape_cast %60 : vector<1x32xf32> to vector<1x1x32xf32>
    %cst_26 = arith.constant dense<0.000000e+00> : vector<1xf32>
    %62 = vector.multi_reduction <add>, %61, %cst_26 [1, 2] : vector<1x1x32xf32> to vector<1xf32>
    %63 = vector.shape_cast %62 : vector<1xf32> to vector<1x1x1xf32>
    %64 = vector.extract %63[0, 0, 0] : f32 from vector<1x1x1xf32>
    %65 = vector.broadcast %64 : f32 to vector<1x1xf32>
    %66 = arith.mulf %65, %36 : vector<1x1xf32>
    %67 = arith.mulf %22, %51 : vector<1x32xf32>
    %68 = arith.subf %7, %67 : vector<1x32xf32>
    %69 = arith.mulf %68, %3 : vector<1x32xf32>
    %70 = vector.shape_cast %69 : vector<1x32xf32> to vector<1x1x32xf32>
    %cst_27 = arith.constant dense<0.000000e+00> : vector<1xf32>
    %71 = vector.multi_reduction <add>, %70, %cst_27 [1, 2] : vector<1x1x32xf32> to vector<1xf32>
    %72 = vector.shape_cast %71 : vector<1xf32> to vector<1x1x1xf32>
    %73 = vector.extract %72[0, 0, 0] : f32 from vector<1x1x1xf32>
    %74 = vector.broadcast %73 : f32 to vector<1x1xf32>
    %75 = arith.mulf %74, %43 : vector<1x1xf32>
    %76 = vector.shape_cast %54 : vector<1x32xf32> to vector<1x32xf32>
    %77 = vector.broadcast %76 : vector<1x32xf32> to vector<8x32xf32>
    %78 = vector.shape_cast %57 : vector<1x32xf32> to vector<1x32xf32>
    %79 = vector.broadcast %78 : vector<1x32xf32> to vector<8x32xf32>
    %cst_28 = arith.constant dense<0.000000e+00> : vector<8x8xf32>
    %80 = tpu.matmul %77, %0, %cst_28 {dimension_numbers = #tpu.dot_dimension_numbers<[1], [1], [0], [0], [0, 0, 1, 0], [], []>} : vector<8x32xf32>, vector<8x32xf32>, vector<8x8xf32> -> vector<8x8xf32>
    %81 = vector.extract_strided_slice %80 {offsets = [0, 0], sizes = [1, 8], strides = [1, 1]} : vector<8x8xf32> to vector<1x8xf32>
    %82 = vector.broadcast %66 : vector<1x1xf32> to vector<1x8xf32>
    %83 = arith.addf %81, %82 : vector<1x8xf32>
    %cst_29 = arith.constant dense<0.000000e+00> : vector<8x8xf32>
    %84 = tpu.matmul %79, %1, %cst_29 {dimension_numbers = #tpu.dot_dimension_numbers<[1], [1], [0], [0], [0, 0, 1, 0], [], []>} : vector<8x32xf32>, vector<8x32xf32>, vector<8x8xf32> -> vector<8x8xf32>
    %85 = vector.extract_strided_slice %84 {offsets = [0, 0], sizes = [1, 8], strides = [1, 1]} : vector<8x8xf32> to vector<1x8xf32>
    %86 = vector.broadcast %75 : vector<1x1xf32> to vector<1x8xf32>
    %87 = arith.addf %85, %86 : vector<1x8xf32>
    %88 = math.cos %83 : vector<1x8xf32>
    %89 = math.sin %83 : vector<1x8xf32>
    %90 = math.cos %87 : vector<1x8xf32>
    %91 = math.sin %87 : vector<1x8xf32>
    %92 = vector.shape_cast %88 : vector<1x8xf32> to vector<1x1x8xf32>
    %cst_30 = arith.constant dense<0.000000e+00> : vector<1xf32>
    %93 = vector.multi_reduction <add>, %92, %cst_30 [1, 2] : vector<1x1x8xf32> to vector<1xf32>
    %94 = vector.shape_cast %93 : vector<1xf32> to vector<1x1x1xf32>
    %95 = vector.extract %94[0, 0, 0] : f32 from vector<1x1x1xf32>
    %96 = vector.broadcast %95 : f32 to vector<1x1xf32>
    %cst_31 = arith.constant 1.250000e-01 : f32
    %97 = vector.broadcast %cst_31 : f32 to vector<1x1xf32>
    %98 = arith.mulf %96, %97 : vector<1x1xf32>
    %99 = vector.shape_cast %89 : vector<1x8xf32> to vector<1x1x8xf32>
    %cst_32 = arith.constant dense<0.000000e+00> : vector<1xf32>
    %100 = vector.multi_reduction <add>, %99, %cst_32 [1, 2] : vector<1x1x8xf32> to vector<1xf32>
    %101 = vector.shape_cast %100 : vector<1xf32> to vector<1x1x1xf32>
    %102 = vector.extract %101[0, 0, 0] : f32 from vector<1x1x1xf32>
    %103 = vector.broadcast %102 : f32 to vector<1x1xf32>
    %cst_33 = arith.constant 1.250000e-01 : f32
    %104 = vector.broadcast %cst_33 : f32 to vector<1x1xf32>
    %105 = arith.mulf %103, %104 : vector<1x1xf32>
    %106 = vector.shape_cast %90 : vector<1x8xf32> to vector<1x1x8xf32>
    %cst_34 = arith.constant dense<0.000000e+00> : vector<1xf32>
    %107 = vector.multi_reduction <add>, %106, %cst_34 [1, 2] : vector<1x1x8xf32> to vector<1xf32>
    %108 = vector.shape_cast %107 : vector<1xf32> to vector<1x1x1xf32>
    %109 = vector.extract %108[0, 0, 0] : f32 from vector<1x1x1xf32>
    %110 = vector.broadcast %109 : f32 to vector<1x1xf32>
    %cst_35 = arith.constant 1.250000e-01 : f32
    %111 = vector.broadcast %cst_35 : f32 to vector<1x1xf32>
    %112 = arith.mulf %110, %111 : vector<1x1xf32>
    %113 = vector.shape_cast %91 : vector<1x8xf32> to vector<1x1x8xf32>
    %cst_36 = arith.constant dense<0.000000e+00> : vector<1xf32>
    %114 = vector.multi_reduction <add>, %113, %cst_36 [1, 2] : vector<1x1x8xf32> to vector<1xf32>
    %115 = vector.shape_cast %114 : vector<1xf32> to vector<1x1x1xf32>
    %116 = vector.extract %115[0, 0, 0] : f32 from vector<1x1x1xf32>
    %117 = vector.broadcast %116 : f32 to vector<1x1xf32>
    %cst_37 = arith.constant 1.250000e-01 : f32
    %118 = vector.broadcast %cst_37 : f32 to vector<1x1xf32>
    %119 = arith.mulf %117, %118 : vector<1x1xf32>
    %120 = arith.mulf %88, %90 : vector<1x8xf32>
    %121 = arith.mulf %89, %91 : vector<1x8xf32>
    %122 = arith.subf %120, %121 : vector<1x8xf32>
    %123 = vector.shape_cast %122 : vector<1x8xf32> to vector<1x1x8xf32>
    %cst_38 = arith.constant dense<0.000000e+00> : vector<1xf32>
    %124 = vector.multi_reduction <add>, %123, %cst_38 [1, 2] : vector<1x1x8xf32> to vector<1xf32>
    %125 = vector.shape_cast %124 : vector<1xf32> to vector<1x1x1xf32>
    %126 = vector.extract %125[0, 0, 0] : f32 from vector<1x1x1xf32>
    %127 = vector.broadcast %126 : f32 to vector<1x1xf32>
    %cst_39 = arith.constant 1.250000e-01 : f32
    %128 = vector.broadcast %cst_39 : f32 to vector<1x1xf32>
    %129 = arith.mulf %127, %128 : vector<1x1xf32>
    %130 = arith.mulf %89, %90 : vector<1x8xf32>
    %131 = arith.mulf %88, %91 : vector<1x8xf32>
    %132 = arith.addf %130, %131 : vector<1x8xf32>
    %133 = vector.shape_cast %132 : vector<1x8xf32> to vector<1x1x8xf32>
    %cst_40 = arith.constant dense<0.000000e+00> : vector<1xf32>
    %134 = vector.multi_reduction <add>, %133, %cst_40 [1, 2] : vector<1x1x8xf32> to vector<1xf32>
    %135 = vector.shape_cast %134 : vector<1xf32> to vector<1x1x1xf32>
    %136 = vector.extract %135[0, 0, 0] : f32 from vector<1x1x1xf32>
    %137 = vector.broadcast %136 : f32 to vector<1x1xf32>
    %cst_41 = arith.constant 1.250000e-01 : f32
    %138 = vector.broadcast %cst_41 : f32 to vector<1x1xf32>
    %139 = arith.mulf %137, %138 : vector<1x1xf32>
    %140 = arith.mulf %98, %112 : vector<1x1xf32>
    %141 = arith.mulf %105, %119 : vector<1x1xf32>
    %142 = arith.subf %140, %141 : vector<1x1xf32>
    %143 = arith.subf %129, %142 : vector<1x1xf32>
    %144 = arith.mulf %98, %119 : vector<1x1xf32>
    %145 = arith.mulf %105, %112 : vector<1x1xf32>
    %146 = arith.addf %144, %145 : vector<1x1xf32>
    %147 = arith.subf %139, %146 : vector<1x1xf32>
    %148 = arith.mulf %143, %143 : vector<1x1xf32>
    %149 = arith.mulf %147, %147 : vector<1x1xf32>
    %150 = arith.addf %148, %149 : vector<1x1xf32>
    %151 = math.sqrt %150 : vector<1x1xf32>
    %c0_42 = arith.constant 0 : index
    %c0_43 = arith.constant 0 : index
    %152 = vector.load %arg8[%c0_42, %c0_43] : memref<1x1xf32, #tpu.memory_space<vmem>>, vector<1x1xf32>
    tpu.vector_store %arg8[%c0_42, %c0_43], %151 {strides = array<i32>} : memref<1x1xf32, #tpu.memory_space<vmem>>, vector<1x1xf32>,
    return
  }
}

</mosaic_0001>

<llo_original>
// kernel: tpu_custom_call.1
$region0: #{tpu_custom_call.1}
  #allocation0 [shape = 'u32[]', space=smem, size = 0x4, offset = 0x4, fixed_abs, tag = 'smem constant byte address 0x4 - core index']
  #allocation1 [shape = 'u32[144,128]{1,0:T(1,128)}', space=vmem, size = 0x12000, scoped, tag = 'internal scratch']
  %s0 = inlined_call_operand.hbm [shape: f32[8,32], index: 0, kind: input, shape index: {}]
  %s1 = inlined_call_operand.hbm [shape: f32[8,32], index: 1, kind: input, shape index: {}]
  %s2 = inlined_call_operand.hbm [shape: f32[1,32], index: 2, kind: input, shape index: {}]
  %s3 = inlined_call_operand.hbm [shape: f32[1,32], index: 3, kind: input, shape index: {}]
  %s4 = inlined_call_operand.hbm [shape: f32[1,32], index: 4, kind: input, shape index: {}]
  %s5 = inlined_call_operand.hbm [shape: f32[1,32], index: 5, kind: input, shape index: {}]
  %s6 = inlined_call_operand.hbm [shape: f32[1,32], index: 6, kind: input, shape index: {}]
  %s7 = inlined_call_operand.hbm [shape: f32[1,32], index: 7, kind: input, shape index: {}]
  %s8 = inlined_call_operand.hbm [shape: f32[1,1], index: 8, kind: output, shape index: {}]
  %s9 = sld [smem:[#allocation0]]
  $region74: #{tpu_custom_call.1} parent=0
    _
  %s11 = ssub.s32 1, %s9
  %s12 = scalar_select 0, %s11, %s9
  $region1: #{tpu_custom_call.1} parent=0
    #allocation2 [shape = 'u8[4096]{0}', space=vmem, size = 0x1000, scoped, tag = 'input window, operand 0, single buffered']
    #allocation3 [shape = 's32[1]{0}', space=sflag, size = 0x4, scoped, tag = 'scoped memory for tpu_custom_call.1']
    #allocation4 [shape = 's32[1]{0}', space=sflag, size = 0x4, scoped, tag = 'scoped memory for tpu_custom_call.1']
    #allocation5 [shape = 'u8[4096]{0}', space=vmem, size = 0x1000, scoped, tag = 'input window, operand 1, single buffered']
    #allocation6 [shape = 's32[1]{0}', space=sflag, size = 0x4, scoped, tag = 'scoped memory for tpu_custom_call.1']
    #allocation7 [shape = 'u8[512]{0}', space=vmem, size = 0x400, scoped, tag = 'input window, operand 2, single buffered']
    #allocation8 [shape = 'u8[512]{0}', space=vmem, size = 0x400, scoped, tag = 'input window, operand 3, single buffered']
    #allocation9 [shape = 's32[1]{0}', space=sflag, size = 0x4, scoped, tag = 'scoped memory for tpu_custom_call.1']
    #allocation10 [shape = 'u8[512]{0}', space=vmem, size = 0x400, scoped, tag = 'input window, operand 4, single buffered']
    #allocation11 [shape = 'u8[512]{0}', space=vmem, size = 0x400, scoped, tag = 'input window, operand 5, single buffered']
    #allocation12 [shape = 's32[1]{0}', space=sflag, size = 0x4, scoped, tag = 'scoped memory for tpu_custom_call.1']
    #allocation13 [shape = 'u8[512]{0}', space=vmem, size = 0x400, scoped, tag = 'input window, operand 6, single buffered']
    #allocation14 [shape = 'u8[512]{0}', space=vmem, size = 0x400, scoped, tag = 'input window, operand 7, single buffered']
    #allocation15 [shape = 's32[1]{0}', space=sflag, size = 0x4, scoped, tag = 'scoped memory for tpu_custom_call.1']
    #allocation16 [shape = 'u8[512]{0}', space=vmem, size = 0x400, scoped, tag = 'output window, operand 0, single buffered']
    %13 = vsyncpa [#allocation3], 0
    %14 = vsyncpa [#allocation6], 0
    %15 = vsyncpa [#allocation9], 0
    %16 = vsyncpa [#allocation12], 0
    %17 = vsyncpa [#allocation15], 0
    %18 = vsyncpa [#allocation4], 0
    // Predicated region
    $region2: #{tpu_custom_call.1} parent=1 // pred_check
      _
    $region3: #{tpu_custom_call.1} parent=1 // pred_check_branch
      %20 = sbr.rel (0) target = $region5
    $region4: #{tpu_custom_call.1} parent=1 // pred_region
      %s22 = ssub.s32 128, 128
      %23 = vsyncadd [#allocation3], %s22
      %s25 = sshll.u32 [#allocation2], 4
      %s26 = int_to_ptr.vmem [resolvable:$true] %s25
      %28 = dma.hbm_to_vmem [thread:$0]  %s0, 128, %s26, [#allocation3]
    $region5: #{tpu_custom_call.1} parent=1 // pred_fallthru
      _
    // Predicated region
    $region6: #{tpu_custom_call.1} parent=1 // pred_check
      _
    $region7: #{tpu_custom_call.1} parent=1 // pred_check_branch
      %30 = sbr.rel (0) target = $region9
    $region8: #{tpu_custom_call.1} parent=1 // pred_region
      %s32 = ssub.s32 128, 128
      %33 = vsyncadd [#allocation6], %s32
      %s35 = sshll.u32 [#allocation5], 4
      %s36 = int_to_ptr.vmem [resolvable:$true] %s35
      %38 = dma.hbm_to_vmem [thread:$0]  %s1, 128, %s36, [#allocation6]
    $region9: #{tpu_custom_call.1} parent=1 // pred_fallthru
      _
    // Predicated region
    $region10: #{tpu_custom_call.1} parent=1 // pred_check
      _
    $region11: #{tpu_custom_call.1} parent=1 // pred_check_branch
      %40 = sbr.rel (0) target = $region13
    $region12: #{tpu_custom_call.1} parent=1 // pred_region
      %s42 = ssub.s32 16, 16
      %43 = vsyncadd [#allocation6], %s42
      %s45 = sshll.u32 [#allocation7], 4
      %s46 = int_to_ptr.vmem [resolvable:$true] %s45
      %48 = dma.hbm_to_vmem [thread:$0]  %s2, 16, %s46, [#allocation6]
    $region13: #{tpu_custom_call.1} parent=1 // pred_fallthru
      _
    // Predicated region
    $region14: #{tpu_custom_call.1} parent=1 // pred_check
      _
    $region15: #{tpu_custom_call.1} parent=1 // pred_check_branch
      %50 = sbr.rel (0) target = $region17
    $region16: #{tpu_custom_call.1} parent=1 // pred_region
      %s52 = ssub.s32 16, 16
      %53 = vsyncadd [#allocation9], %s52
      %s55 = sshll.u32 [#allocation8], 4
      %s56 = int_to_ptr.vmem [resolvable:$true] %s55
      %58 = dma.hbm_to_vmem [thread:$0]  %s3, 16, %s56, [#allocation9]
    $region17: #{tpu_custom_call.1} parent=1 // pred_fallthru
      _
    // Predicated region
    $region18: #{tpu_custom_call.1} parent=1 // pred_check
      _
    $region19: #{tpu_custom_call.1} parent=1 // pred_check_branch
      %60 = sbr.rel (0) target = $region21
    $region20: #{tpu_custom_call.1} parent=1 // pred_region
      %s62 = ssub.s32 16, 16
      %63 = vsyncadd [#allocation9], %s62
      %s65 = sshll.u32 [#allocation10], 4
      %s66 = int_to_ptr.vmem [resolvable:$true] %s65
      %68 = dma.hbm_to_vmem [thread:$0]  %s4, 16, %s66, [#allocation9]
    $region21: #{tpu_custom_call.1} parent=1 // pred_fallthru
      _
    // Predicated region
    $region22: #{tpu_custom_call.1} parent=1 // pred_check
      _
    $region23: #{tpu_custom_call.1} parent=1 // pred_check_branch
      %70 = sbr.rel (0) target = $region25
    $region24: #{tpu_custom_call.1} parent=1 // pred_region
      %s72 = ssub.s32 16, 16
      %73 = vsyncadd [#allocation12], %s72
      %s75 = sshll.u32 [#allocation11], 4
      %s76 = int_to_ptr.vmem [resolvable:$true] %s75
      %78 = dma.hbm_to_vmem [thread:$0]  %s5, 16, %s76, [#allocation12]
    $region25: #{tpu_custom_call.1} parent=1 // pred_fallthru
      _
    // Predicated region
    $region26: #{tpu_custom_call.1} parent=1 // pred_check
      _
    $region27: #{tpu_custom_call.1} parent=1 // pred_check_branch
      %80 = sbr.rel (0) target = $region29
    $region28: #{tpu_custom_call.1} parent=1 // pred_region
      %s82 = ssub.s32 16, 16
      %83 = vsyncadd [#allocation12], %s82
      %s85 = sshll.u32 [#allocation13], 4
      %s86 = int_to_ptr.vmem [resolvable:$true] %s85
      %88 = dma.hbm_to_vmem [thread:$0]  %s6, 16, %s86, [#allocation12]
    $region29: #{tpu_custom_call.1} parent=1 // pred_fallthru
      _
    // Predicated region
    $region30: #{tpu_custom_call.1} parent=1 // pred_check
      _
    $region31: #{tpu_custom_call.1} parent=1 // pred_check_branch
      %90 = sbr.rel (0) target = $region33
    $region32: #{tpu_custom_call.1} parent=1 // pred_region
      %s92 = ssub.s32 16, 16
      %93 = vsyncadd [#allocation15], %s92
      %s95 = sshll.u32 [#allocation14], 4
      %s96 = int_to_ptr.vmem [resolvable:$true] %s95
      %98 = dma.hbm_to_vmem [thread:$0]  %s7, 16, %s96, [#allocation15]
    $region33: #{tpu_custom_call.1} parent=1 // pred_fallthru
      _
    // Predicated region
    $region34: #{tpu_custom_call.1} parent=1 // pred_check
      _
    $region35: #{tpu_custom_call.1} parent=1 // pred_check_branch
      %100 = sbr.rel (0) target = $region37
    $region36: #{tpu_custom_call.1} parent=1 // pred_region
      %101 = dma.done [#allocation3], 128
    $region37: #{tpu_custom_call.1} parent=1 // pred_fallthru
      _
    // Predicated region
    $region38: #{tpu_custom_call.1} parent=1 // pred_check
      _
    $region39: #{tpu_custom_call.1} parent=1 // pred_check_branch
      %103 = sbr.rel (0) target = $region41
    $region40: #{tpu_custom_call.1} parent=1 // pred_region
      %104 = dma.done [#allocation6], 128
    $region41: #{tpu_custom_call.1} parent=1 // pred_fallthru
      _
    // Predicated region
    $region42: #{tpu_custom_call.1} parent=1 // pred_check
      _
    $region43: #{tpu_custom_call.1} parent=1 // pred_check_branch
      %106 = sbr.rel (0) target = $region45
    $region44: #{tpu_custom_call.1} parent=1 // pred_region
      %107 = dma.done [#allocation6], 16
    $region45: #{tpu_custom_call.1} parent=1 // pred_fallthru
      _
    // Predicated region
    $region46: #{tpu_custom_call.1} parent=1 // pred_check
      _
    $region47: #{tpu_custom_call.1} parent=1 // pred_check_branch
      %109 = sbr.rel (0) target = $region49
    $region48: #{tpu_custom_call.1} parent=1 // pred_region
      %110 = dma.done [#allocation9], 16
    $region49: #{tpu_custom_call.1} parent=1 // pred_fallthru
      _
    // Predicated region
    $region50: #{tpu_custom_call.1} parent=1 // pred_check
      _
    $region51: #{tpu_custom_call.1} parent=1 // pred_check_branch
      %112 = sbr.rel (0) target = $region53
    $region52: #{tpu_custom_call.1} parent=1 // pred_region
      %113 = dma.done [#allocation9], 16
    $region53: #{tpu_custom_call.1} parent=1 // pred_fallthru
      _
    // Predicated region
    $region54: #{tpu_custom_call.1} parent=1 // pred_check
      _
    $region55: #{tpu_custom_call.1} parent=1 // pred_check_branch
      %115 = sbr.rel (0) target = $region57
    $region56: #{tpu_custom_call.1} parent=1 // pred_region
      %116 = dma.done [#allocation12], 16
    $region57: #{tpu_custom_call.1} parent=1 // pred_fallthru
      _
    // Predicated region
    $region58: #{tpu_custom_call.1} parent=1 // pred_check
      _
    $region59: #{tpu_custom_call.1} parent=1 // pred_check_branch
      %118 = sbr.rel (0) target = $region61
    $region60: #{tpu_custom_call.1} parent=1 // pred_region
      %119 = dma.done [#allocation12], 16
    $region61: #{tpu_custom_call.1} parent=1 // pred_fallthru
      _
    // Predicated region
    $region62: #{tpu_custom_call.1} parent=1 // pred_check
      _
    $region63: #{tpu_custom_call.1} parent=1 // pred_check_branch
      %121 = sbr.rel (0) target = $region65
    $region64: #{tpu_custom_call.1} parent=1 // pred_region
      %122 = dma.done [#allocation15], 16
    $region65: #{tpu_custom_call.1} parent=1 // pred_fallthru
      _
    %v123 = vld [vmem:[#allocation2] sm:$0xff]
    %v124 = vld [vmem:[#allocation5] sm:$0xff]
    %v125 = vld [vmem:[#allocation7] sm:$0x1]
    %v126 = vld [vmem:[#allocation8] sm:$0x1]
    %v127 = vld [vmem:[#allocation10] sm:$0x1]
    %v128 = vld [vmem:[#allocation11] sm:$0x1]
    %v129 = vld [vmem:[#allocation13] sm:$0x1]
    %v130 = vld [vmem:[#allocation14] sm:$0x1]
    %vm131 = vcmask 261120
    %v132 = vsel %vm131, %v123, 0.0
    %v133 = vrot.slane %v132, 4
    %v134 = vadd.f32 %v132, %v133
    %v135 = vrot.slane %v134, 2
    %v136 = vadd.f32 %v134, %v135
    %v137 = vrot.slane %v136, 1
    %v138 = vadd.f32 %v136, %v137
    %v139 = vmul.f32 %v138, 0.125
    %v140 = vsub.f32 %v123, %v139
    %v141 = vmul.f32 %v140, %v140
    %v142 = vsel %vm131, %v141, 0.0
    %v143 = vrot.slane %v142, 4
    %v144 = vadd.f32 %v142, %v143
    %v145 = vrot.slane %v144, 2
    %v146 = vadd.f32 %v144, %v145
    %v147 = vrot.slane %v146, 1
    %v148 = vadd.f32 %v146, %v147
    %v149 = vmul.f32 %v148, 0.125
    %v150 = vsel %vm131, %v124, 0.0
    %v151 = vrot.slane %v150, 4
    %v152 = vadd.f32 %v150, %v151
    %v153 = vrot.slane %v152, 2
    %v154 = vadd.f32 %v152, %v153
    %v155 = vrot.slane %v154, 1
    %v156 = vadd.f32 %v154, %v155
    %v157 = vmul.f32 %v156, 0.125
    %v158 = vsub.f32 %v124, %v157
    %v159 = vmul.f32 %v158, %v158
    %v160 = vsel %vm131, %v159, 0.0
    %v161 = vrot.slane %v160, 4
    %v162 = vadd.f32 %v160, %v161
    %v163 = vrot.slane %v162, 2
    %v164 = vadd.f32 %v162, %v163
    %v165 = vrot.slane %v164, 1
    %v166 = vadd.f32 %v164, %v165
    %v167 = vmul.f32 %v166, 0.125
    %v168 = vmul.f32 %v125, %v125
    %vm169 = vcmask 253952
    %v170 = vsel %vm169, %v168, 0.0
    %171 = vadd.xlane.f32.xlu0 %v170
    %v172 = vpop.xlane.xlu0 %171
    %v173 = vrot.slane %v172, 4
    %v174 = vadd.f32 %v172, %v173
    %v175 = vrot.slane %v174, 2
    %v176 = vadd.f32 %v174, %v175
    %v177 = vrot.slane %v176, 1
    %v178 = vadd.f32 %v176, %v177
    %s179 = vtos %v178
    %v180 = vstv %s179
    %v181 = vrsqrt.pop %v180
    %v182 = vmul.f32 %v126, %v126
    %v183 = vsel %vm169, %v182, 0.0
    %184 = vadd.xlane.f32.xlu0 %v183
    %v185 = vpop.xlane.xlu0 %184
    %v186 = vrot.slane %v185, 4
    %v187 = vadd.f32 %v185, %v186
    %v188 = vrot.slane %v187, 2
    %v189 = vadd.f32 %v187, %v188
    %v190 = vrot.slane %v189, 1
    %v191 = vadd.f32 %v189, %v190
    %s192 = vtos %v191
    %v193 = vstv %s192
    %v194 = vrsqrt.pop %v193
    %v195 = vadd.f32 %v149, 1e-05
    %v196 = vrsqrt.pop %v195
    %v197 = vmul.f32 %v127, %v196
    %v198 = vadd.f32 %v167, 1e-05
    %v199 = vrsqrt.pop %v198
    %v200 = vmul.f32 %v129, %v199
    %v201 = vmul.f32 %v197, %v125
    %v202 = vmul.f32 %v201, %v181
    %v203 = vmul.f32 %v200, %v126
    %v204 = vmul.f32 %v203, %v194
    %v205 = vmul.f32 %v139, %v197
    %v206 = vsub.f32 %v128, %v205
    %v207 = vmul.f32 %v206, %v125
    %v208 = vsel %vm169, %v207, 0.0
    %209 = vadd.xlane.f32.xlu0 %v208
    %v210 = vpop.xlane.xlu0 %209
    %v211 = vrot.slane %v210, 4
    %v212 = vadd.f32 %v210, %v211
    %v213 = vrot.slane %v212, 2
    %v214 = vadd.f32 %v212, %v213
    %v215 = vrot.slane %v214, 1
    %v216 = vadd.f32 %v214, %v215
    %s217 = vtos %v216
    %v218 = vstv %s217
    %v219 = vmul.f32 %v218, %v181
    %v220 = vmul.f32 %v157, %v200
    %v221 = vsub.f32 %v130, %v220
    %v222 = vmul.f32 %v221, %v126
    %v223 = vsel %vm169, %v222, 0.0
    %224 = vadd.xlane.f32.xlu0 %v223
    %v225 = vpop.xlane.xlu0 %224
    %v226 = vrot.slane %v225, 4
    %v227 = vadd.f32 %v225, %v226
    %v228 = vrot.slane %v227, 2
    %v229 = vadd.f32 %v227, %v228
    %v230 = vrot.slane %v229, 1
    %v231 = vadd.f32 %v229, %v230
    %s232 = vtos %v231
    %v233 = vstv %s232
    %v234 = vmul.f32 %v233, %v194
    %v236 = vlaneseq
    %v237 = vshrl.u32 %v236, 7
    %v238 = vsub.s32 0, %v237
    %v239 = vrot.slane %v202, %v238
    %v241 = vlaneseq
    %v242 = vshrl.u32 %v241, 7
    %v243 = vsub.s32 0, %v242
    %v244 = vrot.slane %v204, %v243
    %v245 = vsel %vm131, %v239, 0
    %v248 = vsel %vm131, %v123, 0
    %250 = vmatprep.subr.mxu0 0.0
    %251 = vmatpush1.xpose.msra.mxu0 %v248
    %252 = vmatprep.subr.mxu0 0.0
    %253 = vmatpush1.xpose.msra.mxu0 0.0
    %254 = vmatprep.subr.mxu0 0.0
    %255 = vmatpush1.xpose.msra.mxu0 0.0
    %256 = vmatprep.subr.mxu0 0.0
    %257 = vmatpush1.xpose.msra.mxu0 0.0
    %258 = vmatprep.subr.mxu0 0.0
    %259 = vmatpush1.xpose.msra.mxu0 0.0
    %260 = vmatprep.subr.mxu0 0.0
    %261 = vmatpush1.xpose.msra.mxu0 0.0
    %262 = vmatprep.subr.mxu0 0.0
    %263 = vmatpush1.xpose.msra.mxu0 0.0
    %264 = vmatprep.subr.mxu0 0.0
    %265 = vmatpush1.xpose.msra.mxu0 0.0
    %266 = vmatprep.subr.mxu0 0.0
    %267 = vmatpush1.xpose.msra.mxu0 0.0
    %268 = vmatprep.subr.mxu0 0.0
    %269 = vmatpush1.xpose.msra.mxu0 0.0
    %270 = vmatprep.subr.mxu0 0.0
    %271 = vmatpush1.xpose.msra.mxu0 0.0
    %272 = vmatprep.subr.mxu0 0.0
    %273 = vmatpush1.xpose.msra.mxu0 0.0
    %274 = vmatprep.subr.mxu0 0.0
    %275 = vmatpush1.xpose.msra.mxu0 0.0
    %276 = vmatprep.subr.mxu0 0.0
    %277 = vmatpush1.xpose.msra.mxu0 0.0
    %278 = vmatprep.subr.mxu0 0.0
    %279 = vmatpush1.xpose.msra.mxu0 0.0
    %280 = vmatprep.subr.mxu0 0.0
    %281 = vmatpush1.xpose.msra.mxu0 0.0
    %282 = vmatprep.subr.mxu0 0.0
    %283 = vmatpush1.xpose.msra.mxu0 0.0
    %284 = vmatprep.subr.mxu0 0.0
    %285 = vmatpush1.xpose.msra.mxu0 0.0
    %286 = vmatprep.subr.mxu0 0.0
    %287 = vmatpush1.xpose.msra.mxu0 0.0
    %288 = vmatprep.subr.mxu0 0.0
    %289 = vmatpush1.xpose.msra.mxu0 0.0
    %290 = vmatprep.subr.mxu0 0.0
    %291 = vmatpush1.xpose.msra.mxu0 0.0
    %292 = vmatprep.subr.mxu0 0.0
    %293 = vmatpush1.xpose.msra.mxu0 0.0
    %294 = vmatprep.subr.mxu0 0.0
    %295 = vmatpush1.xpose.msra.mxu0 0.0
    %296 = vmatprep.subr.mxu0 0.0
    %297 = vmatpush1.xpose.msra.mxu0 0.0
    %298 = vmatprep.subr.mxu0 0.0
    %299 = vmatpush1.xpose.msra.mxu0 0.0
    %300 = vmatprep.subr.mxu0 0.0
    %301 = vmatpush1.xpose.msra.mxu0 0.0
    %302 = vmatprep.subr.mxu0 0.0
    %303 = vmatpush1.xpose.msra.mxu0 0.0
    %304 = vmatprep.subr.mxu0 0.0
    %305 = vmatpush1.xpose.msra.mxu0 0.0
    %306 = vmatprep.subr.mxu0 0.0
    %307 = vmatpush1.xpose.msra.mxu0 0.0
    %308 = vmatprep.subr.mxu0 0.0
    %309 = vmatpush1.xpose.msra.mxu0 0.0
    %310 = vmatprep.subr.mxu0 0.0
    %311 = vmatpush1.xpose.msra.mxu0 0.0
    %312 = vmatprep.subr.mxu0 0.0
    %313 = vmatpush1.xpose.msra.mxu0 0.0
    %314 = vmatprep.mubr.f32.mxu0 0.0
    %315 = vmatmul.mubr.f32.gmra.mrb[0].mxu0 %v245
    %v316 = vpop.f32.mrb[0].mxu0
    %v317 = vadd.f32 0.0, %v316
    %v318 = vpop.f32.mrb[0].mxu0
    %319 = vdwg.mxu0
    %v320 = vadd.f32 %v317, %v219
    %v321 = vsel %vm131, %v244, 0
    %v324 = vsel %vm131, %v124, 0
    %326 = vmatprep.subr.mxu0 0.0
    %327 = vmatpush1.xpose.msra.mxu0 %v324
    %328 = vmatprep.subr.mxu0 0.0
    %329 = vmatpush1.xpose.msra.mxu0 0.0
    %330 = vmatprep.subr.mxu0 0.0
    %331 = vmatpush1.xpose.msra.mxu0 0.0
    %332 = vmatprep.subr.mxu0 0.0
    %333 = vmatpush1.xpose.msra.mxu0 0.0
    %334 = vmatprep.subr.mxu0 0.0
    %335 = vmatpush1.xpose.msra.mxu0 0.0
    %336 = vmatprep.subr.mxu0 0.0
    %337 = vmatpush1.xpose.msra.mxu0 0.0
    %338 = vmatprep.subr.mxu0 0.0
    %339 = vmatpush1.xpose.msra.mxu0 0.0
    %340 = vmatprep.subr.mxu0 0.0
    %341 = vmatpush1.xpose.msra.mxu0 0.0
    %342 = vmatprep.subr.mxu0 0.0
    %343 = vmatpush1.xpose.msra.mxu0 0.0
    %344 = vmatprep.subr.mxu0 0.0
    %345 = vmatpush1.xpose.msra.mxu0 0.0
    %346 = vmatprep.subr.mxu0 0.0
    %347 = vmatpush1.xpose.msra.mxu0 0.0
    %348 = vmatprep.subr.mxu0 0.0
    %349 = vmatpush1.xpose.msra.mxu0 0.0
    %350 = vmatprep.subr.mxu0 0.0
    %351 = vmatpush1.xpose.msra.mxu0 0.0
    %352 = vmatprep.subr.mxu0 0.0
    %353 = vmatpush1.xpose.msra.mxu0 0.0
    %354 = vmatprep.subr.mxu0 0.0
    %355 = vmatpush1.xpose.msra.mxu0 0.0
    %356 = vmatprep.subr.mxu0 0.0
    %357 = vmatpush1.xpose.msra.mxu0 0.0
    %358 = vmatprep.subr.mxu0 0.0
    %359 = vmatpush1.xpose.msra.mxu0 0.0
    %360 = vmatprep.subr.mxu0 0.0
    %361 = vmatpush1.xpose.msra.mxu0 0.0
    %362 = vmatprep.subr.mxu0 0.0
    %363 = vmatpush1.xpose.msra.mxu0 0.0
    %364 = vmatprep.subr.mxu0 0.0
    %365 = vmatpush1.xpose.msra.mxu0 0.0
    %366 = vmatprep.subr.mxu0 0.0
    %367 = vmatpush1.xpose.msra.mxu0 0.0
    %368 = vmatprep.subr.mxu0 0.0
    %369 = vmatpush1.xpose.msra.mxu0 0.0
    %370 = vmatprep.subr.mxu0 0.0
    %371 = vmatpush1.xpose.msra.mxu0 0.0
    %372 = vmatprep.subr.mxu0 0.0
    %373 = vmatpush1.xpose.msra.mxu0 0.0
    %374 = vmatprep.subr.mxu0 0.0
    %375 = vmatpush1.xpose.msra.mxu0 0.0
    %376 = vmatprep.subr.mxu0 0.0
    %377 = vmatpush1.xpose.msra.mxu0 0.0
    %378 = vmatprep.subr.mxu0 0.0
    %379 = vmatpush1.xpose.msra.mxu0 0.0
    %380 = vmatprep.subr.mxu0 0.0
    %381 = vmatpush1.xpose.msra.mxu0 0.0
    %382 = vmatprep.subr.mxu0 0.0
    %383 = vmatpush1.xpose.msra.mxu0 0.0
    %384 = vmatprep.subr.mxu0 0.0
    %385 = vmatpush1.xpose.msra.mxu0 0.0
    %386 = vmatprep.subr.mxu0 0.0
    %387 = vmatpush1.xpose.msra.mxu0 0.0
    %388 = vmatprep.subr.mxu0 0.0
    %389 = vmatpush1.xpose.msra.mxu0 0.0
    %390 = vmatprep.mubr.f32.mxu0 0.0
    %391 = vmatmul.mubr.f32.gmra.mrb[0].mxu0 %v321
    %v392 = vpop.f32.mrb[0].mxu0
    %v393 = vadd.f32 0.0, %v392
    %v394 = vpop.f32.mrb[0].mxu0
    %395 = vdwg.mxu0
    %v396 = vadd.f32 %v393, %v234
    %v397 = vand.u32 2147483647, %v320
    %vm398 = vcmp.le.f32.partialorder %v397, 0.7853982
    %vm399 = vcmp.lt.s32.totalorder %v320, 0
    %v400 = vand.u32 %v320, 2139095040
    %v401 = vshrl.u32 %v400, 23
    %v402 = vsub.s32 %v401, 127
    %v403 = vand.u32 2147483647, %v320
    %v404 = vand.u32 %v403, 8388607
    %v405 = vor.u32 %v404, 8388608
    %v406 = vsub.s32 0, %v405
    %v407 = vadd.s32 %v402, 1
    %vm408 = vcmp.gt.s32.totalorder %v407, 0
    %v409 = vsel %vm408, %v407, 0
    %v410 = vshrl.u32 %v409, 5
    %v411 = vand.u32 %v409, 31
    %v412 = vsub.s32 32, %v411
    %v413 = vshrl.u32 683565275, %v412
    %v414 = vshll.u32 683565275, %v411
    %v415 = vshrl.u32 2475754826, %v412
    %v416 = vor.u32 %v414, %v415
    %v417 = vshll.u32 2475754826, %v411
    %v418 = vshrl.u32 2131351028, %v412
    %v419 = vor.u32 %v417, %v418
    %v420 = vshll.u32 2131351028, %v411
    %v421 = vshrl.u32 2102212464, %v412
    %v422 = vor.u32 %v420, %v421
    %v423 = vshll.u32 2102212464, %v411
    %v424 = vshrl.u32 920167782, %v412
    %v425 = vor.u32 %v423, %v424
    %v426 = vshll.u32 920167782, %v411
    %v427 = vshrl.u32 1326507024, %v412
    %v428 = vor.u32 %v426, %v427
    %vm429 = vcmp.lt.s32.totalorder %v410, 1
    %vm430 = vcmp.lt.s32.totalorder %v410, 2
    %vm431 = vcmp.lt.s32.totalorder %v410, 3
    %vm432 = vcmp.lt.s32.totalorder %v410, 4
    %v433 = vsel %vm429, %v413, %v416
    %v434 = vsel %vm432, %v422, 2102212464
    %v435 = vsel %vm431, %v419, %v434
    %v436 = vsel %vm430, %v433, %v435
    %v437 = vsel %vm429, %v416, %v419
    %v438 = vsel %vm432, %v425, 920167782
    %v439 = vsel %vm431, %v422, %v438
    %v440 = vsel %vm430, %v437, %v439
    %v441 = vsel %vm429, %v419, %v422
    %v442 = vsel %vm432, %v428, 1326507024
    %v443 = vsel %vm431, %v425, %v442
    %v444 = vsel %vm430, %v441, %v443
    %v445 = vshll.u32 %v405, 8
    %v446 = vmul.u32.u64.compose %v445, %v444
    %v447 = vextract.low.u32 %v446
    %v448 = vextract.high.u32 %v446
    %v449 = vmul.u32.u64.compose %v445, %v440
    %v450 = vextract.low.u32 %v449
    %v451 = vextract.high.u32 %v449
    %v452 = vmul.u32 %v445, %v436
    %v453 = vadd.s32 %v448, %v450
    %vm454 = vc.u32 %v448, %v450
    %v455 = vadd.s32 %v451, 1
    %v456 = vsel %vm454, %v455, %v451
    %v457 = vadd.s32 %v452, %v456
    %v458 = vadd.s32 %v457, 536870912
    %v459 = vshrl.u32 %v458, 30
    %v460 = vshll.u32 %v459, 30
    %v461 = vsub.s32 %v457, %v460
    %vm462 = vcmp.lt.s32.totalorder %v461, 0
    %v463 = vsub.s32 0, %v461
    %v464 = vsel %vm462, %v463, %v461
    %v465 = vclz %v464
    %v466 = vsub.s32 %v465, 2
    %vm467 = vcmp.gt.s32.totalorder 0, %v466
    %v468 = vsel %vm467, 0, %v466
    %v469 = vsub.s32 32, %v468
    %v470 = vshll.u32 %v461, %v468
    %v471 = vshrl.u32 %v453, %v469
    %v472 = vor.u32 %v470, %v471
    %v473 = vsub.s32 4294967266, %v468
    %v474 = vadd.s32 %v473, 127
    %v475 = vshll.u32 %v474, 23
    %v476 = vor.u32 4788187, %v475
    %v477 = vand.u32 2147483647, %v476
    %v479 = vcvt.s32.f32 %v472
    %v480 = vmul.f32 %v479, %v477
    %v481 = vxor.u32 %v480, 2147483648
    %v482 = vsel %vm399, %v481, %v480
    %v483 = vsub.s32 4, %v459
    %v484 = vsel %vm399, %v483, %v459
    %v485 = vsel %vm398, %v320, %v482
    %v486 = vsel %vm398, 0, %v484
    %v487 = vcosq.f32.pop %v485
    %v488 = vsinq.f32.pop %v485
    %vm489 = vweird.f32 %v320
    %v490 = vand.u32 %v486, 3
    %vm491 = vcmp.lt.s32.totalorder %v490, 2
    %vm492 = vcmp.eq.s32.totalorder %v490, 0
    %v493 = vxor.u32 %v488, 2147483648
    %v494 = vsel %vm492, %v487, %v493
    %vm495 = vcmp.eq.s32.totalorder %v490, 2
    %v496 = vxor.u32 %v487, 2147483648
    %v497 = vsel %vm495, %v496, %v488
    %v498 = vsel %vm491, %v494, %v497
    %v499 = vsel %vm489, nan, %v498
    %v500 = vand.u32 2147483647, %v320
    %vm501 = vcmp.le.f32.partialorder %v500, 0.7853982
    %vm502 = vcmp.lt.s32.totalorder %v320, 0
    %v503 = vand.u32 %v320, 2139095040
    %v504 = vshrl.u32 %v503, 23
    %v505 = vsub.s32 %v504, 127
    %v506 = vand.u32 2147483647, %v320
    %v507 = vand.u32 %v506, 8388607
    %v508 = vor.u32 %v507, 8388608
    %v509 = vsub.s32 0, %v508
    %v510 = vadd.s32 %v505, 1
    %vm511 = vcmp.gt.s32.totalorder %v510, 0
    %v512 = vsel %vm511, %v510, 0
    %v513 = vshrl.u32 %v512, 5
    %v514 = vand.u32 %v512, 31
    %v515 = vsub.s32 32, %v514
    %v516 = vshrl.u32 683565275, %v515
    %v517 = vshll.u32 683565275, %v514
    %v518 = vshrl.u32 2475754826, %v515
    %v519 = vor.u32 %v517, %v518
    %v520 = vshll.u32 2475754826, %v514
    %v521 = vshrl.u32 2131351028, %v515
    %v522 = vor.u32 %v520, %v521
    %v523 = vshll.u32 2131351028, %v514
    %v524 = vshrl.u32 2102212464, %v515
    %v525 = vor.u32 %v523, %v524
    %v526 = vshll.u32 2102212464, %v514
    %v527 = vshrl.u32 920167782, %v515
    %v528 = vor.u32 %v526, %v527
    %v529 = vshll.u32 920167782, %v514
    %v530 = vshrl.u32 1326507024, %v515
    %v531 = vor.u32 %v529, %v530
    %vm532 = vcmp.lt.s32.totalorder %v513, 1
    %vm533 = vcmp.lt.s32.totalorder %v513, 2
    %vm534 = vcmp.lt.s32.totalorder %v513, 3
    %vm535 = vcmp.lt.s32.totalorder %v513, 4
    %v536 = vsel %vm532, %v516, %v519
    %v537 = vsel %vm535, %v525, 2102212464
    %v538 = vsel %vm534, %v522, %v537
    %v539 = vsel %vm533, %v536, %v538
    %v540 = vsel %vm532, %v519, %v522
    %v541 = vsel %vm535, %v528, 920167782
    %v542 = vsel %vm534, %v525, %v541
    %v543 = vsel %vm533, %v540, %v542
    %v544 = vsel %vm532, %v522, %v525
    %v545 = vsel %vm535, %v531, 1326507024
    %v546 = vsel %vm534, %v528, %v545
    %v547 = vsel %vm533, %v544, %v546
    %v548 = vshll.u32 %v508, 8
    %v549 = vmul.u32.u64.compose %v548, %v547
    %v550 = vextract.low.u32 %v549
    %v551 = vextract.high.u32 %v549
    %v552 = vmul.u32.u64.compose %v548, %v543
    %v553 = vextract.low.u32 %v552
    %v554 = vextract.high.u32 %v552
    %v555 = vmul.u32 %v548, %v539
    %v556 = vadd.s32 %v551, %v553
    %vm557 = vc.u32 %v551, %v553
    %v558 = vadd.s32 %v554, 1
    %v559 = vsel %vm557, %v558, %v554
    %v560 = vadd.s32 %v555, %v559
    %v561 = vadd.s32 %v560, 536870912
    %v562 = vshrl.u32 %v561, 30
    %v563 = vshll.u32 %v562, 30
    %v564 = vsub.s32 %v560, %v563
    %vm565 = vcmp.lt.s32.totalorder %v564, 0
    %v566 = vsub.s32 0, %v564
    %v567 = vsel %vm565, %v566, %v564
    %v568 = vclz %v567
    %v569 = vsub.s32 %v568, 2
    %vm570 = vcmp.gt.s32.totalorder 0, %v569
    %v571 = vsel %vm570, 0, %v569
    %v572 = vsub.s32 32, %v571
    %v573 = vshll.u32 %v564, %v571
    %v574 = vshrl.u32 %v556, %v572
    %v575 = vor.u32 %v573, %v574
    %v576 = vsub.s32 4294967266, %v571
    %v577 = vadd.s32 %v576, 127
    %v578 = vshll.u32 %v577, 23
    %v579 = vor.u32 4788187, %v578
    %v580 = vand.u32 2147483647, %v579
    %v582 = vcvt.s32.f32 %v575
    %v583 = vmul.f32 %v582, %v580
    %v584 = vxor.u32 %v583, 2147483648
    %v585 = vsel %vm502, %v584, %v583
    %v586 = vsub.s32 4, %v562
    %v587 = vsel %vm502, %v586, %v562
    %v588 = vsel %vm501, %v320, %v585
    %v589 = vsel %vm501, 0, %v587
    %v590 = vcosq.f32.pop %v588
    %v591 = vsinq.f32.pop %v588
    %vm592 = vweird.f32 %v320
    %v593 = vadd.s32 %v589, 3
    %v594 = vand.u32 %v593, 3
    %vm595 = vcmp.lt.s32.totalorder %v594, 2
    %vm596 = vcmp.eq.s32.totalorder %v594, 0
    %v597 = vxor.u32 %v591, 2147483648
    %v598 = vsel %vm596, %v590, %v597
    %vm599 = vcmp.eq.s32.totalorder %v594, 2
    %v600 = vxor.u32 %v590, 2147483648
    %v601 = vsel %vm599, %v600, %v591
    %v602 = vsel %vm595, %v598, %v601
    %v603 = vsel %vm592, nan, %v602
    %v604 = vand.u32 2147483647, %v396
    %vm605 = vcmp.le.f32.partialorder %v604, 0.7853982
    %vm606 = vcmp.lt.s32.totalorder %v396, 0
    %v607 = vand.u32 %v396, 2139095040
    %v608 = vshrl.u32 %v607, 23
    %v609 = vsub.s32 %v608, 127
    %v610 = vand.u32 2147483647, %v396
    %v611 = vand.u32 %v610, 8388607
    %v612 = vor.u32 %v611, 8388608
    %v613 = vsub.s32 0, %v612
    %v614 = vadd.s32 %v609, 1
    %vm615 = vcmp.gt.s32.totalorder %v614, 0
    %v616 = vsel %vm615, %v614, 0
    %v617 = vshrl.u32 %v616, 5
    %v618 = vand.u32 %v616, 31
    %v619 = vsub.s32 32, %v618
    %v620 = vshrl.u32 683565275, %v619
    %v621 = vshll.u32 683565275, %v618
    %v622 = vshrl.u32 2475754826, %v619
    %v623 = vor.u32 %v621, %v622
    %v624 = vshll.u32 2475754826, %v618
    %v625 = vshrl.u32 2131351028, %v619
    %v626 = vor.u32 %v624, %v625
    %v627 = vshll.u32 2131351028, %v618
    %v628 = vshrl.u32 2102212464, %v619
    %v629 = vor.u32 %v627, %v628
    %v630 = vshll.u32 2102212464, %v618
    %v631 = vshrl.u32 920167782, %v619
    %v632 = vor.u32 %v630, %v631
    %v633 = vshll.u32 920167782, %v618
    %v634 = vshrl.u32 1326507024, %v619
    %v635 = vor.u32 %v633, %v634
    %vm636 = vcmp.lt.s32.totalorder %v617, 1
    %vm637 = vcmp.lt.s32.totalorder %v617, 2
    %vm638 = vcmp.lt.s32.totalorder %v617, 3
    %vm639 = vcmp.lt.s32.totalorder %v617, 4
    %v640 = vsel %vm636, %v620, %v623
    %v641 = vsel %vm639, %v629, 2102212464
    %v642 = vsel %vm638, %v626, %v641
    %v643 = vsel %vm637, %v640, %v642
    %v644 = vsel %vm636, %v623, %v626
    %v645 = vsel %vm639, %v632, 920167782
    %v646 = vsel %vm638, %v629, %v645
    %v647 = vsel %vm637, %v644, %v646
    %v648 = vsel %vm636, %v626, %v629
    %v649 = vsel %vm639, %v635, 1326507024
    %v650 = vsel %vm638, %v632, %v649
    %v651 = vsel %vm637, %v648, %v650
    %v652 = vshll.u32 %v612, 8
    %v653 = vmul.u32.u64.compose %v652, %v651
    %v654 = vextract.low.u32 %v653
    %v655 = vextract.high.u32 %v653
    %v656 = vmul.u32.u64.compose %v652, %v647
    %v657 = vextract.low.u32 %v656
    %v658 = vextract.high.u32 %v656
    %v659 = vmul.u32 %v652, %v643
    %v660 = vadd.s32 %v655, %v657
    %vm661 = vc.u32 %v655, %v657
    %v662 = vadd.s32 %v658, 1
    %v663 = vsel %vm661, %v662, %v658
    %v664 = vadd.s32 %v659, %v663
    %v665 = vadd.s32 %v664, 536870912
    %v666 = vshrl.u32 %v665, 30
    %v667 = vshll.u32 %v666, 30
    %v668 = vsub.s32 %v664, %v667
    %vm669 = vcmp.lt.s32.totalorder %v668, 0
    %v670 = vsub.s32 0, %v668
    %v671 = vsel %vm669, %v670, %v668
    %v672 = vclz %v671
    %v673 = vsub.s32 %v672, 2
    %vm674 = vcmp.gt.s32.totalorder 0, %v673
    %v675 = vsel %vm674, 0, %v673
    %v676 = vsub.s32 32, %v675
    %v677 = vshll.u32 %v668, %v675
    %v678 = vshrl.u32 %v660, %v676
    %v679 = vor.u32 %v677, %v678
    %v680 = vsub.s32 4294967266, %v675
    %v681 = vadd.s32 %v680, 127
    %v682 = vshll.u32 %v681, 23
    %v683 = vor.u32 4788187, %v682
    %v684 = vand.u32 2147483647, %v683
    %v686 = vcvt.s32.f32 %v679
    %v687 = vmul.f32 %v686, %v684
    %v688 = vxor.u32 %v687, 2147483648
    %v689 = vsel %vm606, %v688, %v687
    %v690 = vsub.s32 4, %v666
    %v691 = vsel %vm606, %v690, %v666
    %v692 = vsel %vm605, %v396, %v689
    %v693 = vsel %vm605, 0, %v691
    %v694 = vcosq.f32.pop %v692
    %v695 = vsinq.f32.pop %v692
    %vm696 = vweird.f32 %v396
    %v697 = vand.u32 %v693, 3
    %vm698 = vcmp.lt.s32.totalorder %v697, 2
    %vm699 = vcmp.eq.s32.totalorder %v697, 0
    %v700 = vxor.u32 %v695, 2147483648
    %v701 = vsel %vm699, %v694, %v700
    %vm702 = vcmp.eq.s32.totalorder %v697, 2
    %v703 = vxor.u32 %v694, 2147483648
    %v704 = vsel %vm702, %v703, %v695
    %v705 = vsel %vm698, %v701, %v704
    %v706 = vsel %vm696, nan, %v705
    %v707 = vand.u32 2147483647, %v396
    %vm708 = vcmp.le.f32.partialorder %v707, 0.7853982
    %vm709 = vcmp.lt.s32.totalorder %v396, 0
    %v710 = vand.u32 %v396, 2139095040
    %v711 = vshrl.u32 %v710, 23
    %v712 = vsub.s32 %v711, 127
    %v713 = vand.u32 2147483647, %v396
    %v714 = vand.u32 %v713, 8388607
    %v715 = vor.u32 %v714, 8388608
    %v716 = vsub.s32 0, %v715
    %v717 = vadd.s32 %v712, 1
    %vm718 = vcmp.gt.s32.totalorder %v717, 0
    %v719 = vsel %vm718, %v717, 0
    %v720 = vshrl.u32 %v719, 5
    %v721 = vand.u32 %v719, 31
    %v722 = vsub.s32 32, %v721
    %v723 = vshrl.u32 683565275, %v722
    %v724 = vshll.u32 683565275, %v721
    %v725 = vshrl.u32 2475754826, %v722
    %v726 = vor.u32 %v724, %v725
    %v727 = vshll.u32 2475754826, %v721
    %v728 = vshrl.u32 2131351028, %v722
    %v729 = vor.u32 %v727, %v728
    %v730 = vshll.u32 2131351028, %v721
    %v731 = vshrl.u32 2102212464, %v722
    %v732 = vor.u32 %v730, %v731
    %v733 = vshll.u32 2102212464, %v721
    %v734 = vshrl.u32 920167782, %v722
    %v735 = vor.u32 %v733, %v734
    %v736 = vshll.u32 920167782, %v721
    %v737 = vshrl.u32 1326507024, %v722
    %v738 = vor.u32 %v736, %v737
    %vm739 = vcmp.lt.s32.totalorder %v720, 1
    %vm740 = vcmp.lt.s32.totalorder %v720, 2
    %vm741 = vcmp.lt.s32.totalorder %v720, 3
    %vm742 = vcmp.lt.s32.totalorder %v720, 4
    %v743 = vsel %vm739, %v723, %v726
    %v744 = vsel %vm742, %v732, 2102212464
    %v745 = vsel %vm741, %v729, %v744
    %v746 = vsel %vm740, %v743, %v745
    %v747 = vsel %vm739, %v726, %v729
    %v748 = vsel %vm742, %v735, 920167782
    %v749 = vsel %vm741, %v732, %v748
    %v750 = vsel %vm740, %v747, %v749
    %v751 = vsel %vm739, %v729, %v732
    %v752 = vsel %vm742, %v738, 1326507024
    %v753 = vsel %vm741, %v735, %v752
    %v754 = vsel %vm740, %v751, %v753
    %v755 = vshll.u32 %v715, 8
    %v756 = vmul.u32.u64.compose %v755, %v754
    %v757 = vextract.low.u32 %v756
    %v758 = vextract.high.u32 %v756
    %v759 = vmul.u32.u64.compose %v755, %v750
    %v760 = vextract.low.u32 %v759
    %v761 = vextract.high.u32 %v759
    %v762 = vmul.u32 %v755, %v746
    %v763 = vadd.s32 %v758, %v760
    %vm764 = vc.u32 %v758, %v760
    %v765 = vadd.s32 %v761, 1
    %v766 = vsel %vm764, %v765, %v761
    %v767 = vadd.s32 %v762, %v766
    %v768 = vadd.s32 %v767, 536870912
    %v769 = vshrl.u32 %v768, 30
    %v770 = vshll.u32 %v769, 30
    %v771 = vsub.s32 %v767, %v770
    %vm772 = vcmp.lt.s32.totalorder %v771, 0
    %v773 = vsub.s32 0, %v771
    %v774 = vsel %vm772, %v773, %v771
    %v775 = vclz %v774
    %v776 = vsub.s32 %v775, 2
    %vm777 = vcmp.gt.s32.totalorder 0, %v776
    %v778 = vsel %vm777, 0, %v776
    %v779 = vsub.s32 32, %v778
    %v780 = vshll.u32 %v771, %v778
    %v781 = vshrl.u32 %v763, %v779
    %v782 = vor.u32 %v780, %v781
    %v783 = vsub.s32 4294967266, %v778
    %v784 = vadd.s32 %v783, 127
    %v785 = vshll.u32 %v784, 23
    %v786 = vor.u32 4788187, %v785
    %v787 = vand.u32 2147483647, %v786
    %v789 = vcvt.s32.f32 %v782
    %v790 = vmul.f32 %v789, %v787
    %v791 = vxor.u32 %v790, 2147483648
    %v792 = vsel %vm709, %v791, %v790
    %v793 = vsub.s32 4, %v769
    %v794 = vsel %vm709, %v793, %v769
    %v795 = vsel %vm708, %v396, %v792
    %v796 = vsel %vm708, 0, %v794
    %v797 = vcosq.f32.pop %v795
    %v798 = vsinq.f32.pop %v795
    %vm799 = vweird.f32 %v396
    %v800 = vadd.s32 %v796, 3
    %v801 = vand.u32 %v800, 3
    %vm802 = vcmp.lt.s32.totalorder %v801, 2
    %vm803 = vcmp.eq.s32.totalorder %v801, 0
    %v804 = vxor.u32 %v798, 2147483648
    %v805 = vsel %vm803, %v797, %v804
    %vm806 = vcmp.eq.s32.totalorder %v801, 2
    %v807 = vxor.u32 %v797, 2147483648
    %v808 = vsel %vm806, %v807, %v798
    %v809 = vsel %vm802, %v805, %v808
    %v810 = vsel %vm799, nan, %v809
    %vm811 = vcmask 57344
    %v812 = vsel %vm811, %v499, 0.0
    %813 = vadd.xlane.f32.xlu0 %v812
    %v814 = vpop.xlane.xlu0 %813
    %v815 = vrot.slane %v814, 4
    %v816 = vadd.f32 %v814, %v815
    %v817 = vrot.slane %v816, 2
    %v818 = vadd.f32 %v816, %v817
    %v819 = vrot.slane %v818, 1
    %v820 = vadd.f32 %v818, %v819
    %s821 = vtos %v820
    %v822 = vstv %s821
    %v823 = vmul.f32 %v822, 0.125
    %v824 = vsel %vm811, %v603, 0.0
    %825 = vadd.xlane.f32.xlu0 %v824
    %v826 = vpop.xlane.xlu0 %825
    %v827 = vrot.slane %v826, 4
    %v828 = vadd.f32 %v826, %v827
    %v829 = vrot.slane %v828, 2
    %v830 = vadd.f32 %v828, %v829
    %v831 = vrot.slane %v830, 1
    %v832 = vadd.f32 %v830, %v831
    %s833 = vtos %v832
    %v834 = vstv %s833
    %v835 = vmul.f32 %v834, 0.125
    %v836 = vsel %vm811, %v706, 0.0
    %837 = vadd.xlane.f32.xlu0 %v836
    %v838 = vpop.xlane.xlu0 %837
    %v839 = vrot.slane %v838, 4
    %v840 = vadd.f32 %v838, %v839
    %v841 = vrot.slane %v840, 2
    %v842 = vadd.f32 %v840, %v841
    %v843 = vrot.slane %v842, 1
    %v844 = vadd.f32 %v842, %v843
    %s845 = vtos %v844
    %v846 = vstv %s845
    %v847 = vmul.f32 %v846, 0.125
    %v848 = vsel %vm811, %v810, 0.0
    %849 = vadd.xlane.f32.xlu0 %v848
    %v850 = vpop.xlane.xlu0 %849
    %v851 = vrot.slane %v850, 4
    %v852 = vadd.f32 %v850, %v851
    %v853 = vrot.slane %v852, 2
    %v854 = vadd.f32 %v852, %v853
    %v855 = vrot.slane %v854, 1
    %v856 = vadd.f32 %v854, %v855
    %s857 = vtos %v856
    %v858 = vstv %s857
    %v859 = vmul.f32 %v858, 0.125
    %v860 = vmul.f32 %v499, %v706
    %v861 = vmul.f32 %v603, %v810
    %v862 = vsub.f32 %v860, %v861
    %v863 = vsel %vm811, %v862, 0.0
    %864 = vadd.xlane.f32.xlu0 %v863
    %v865 = vpop.xlane.xlu0 %864
    %v866 = vrot.slane %v865, 4
    %v867 = vadd.f32 %v865, %v866
    %v868 = vrot.slane %v867, 2
    %v869 = vadd.f32 %v867, %v868
    %v870 = vrot.slane %v869, 1
    %v871 = vadd.f32 %v869, %v870
    %s872 = vtos %v871
    %v873 = vstv %s872
    %v874 = vmul.f32 %v873, 0.125
    %v875 = vmul.f32 %v603, %v706
    %v876 = vmul.f32 %v499, %v810
    %v877 = vadd.f32 %v875, %v876
    %v878 = vsel %vm811, %v877, 0.0
    %879 = vadd.xlane.f32.xlu0 %v878
    %v880 = vpop.xlane.xlu0 %879
    %v881 = vrot.slane %v880, 4
    %v882 = vadd.f32 %v880, %v881
    %v883 = vrot.slane %v882, 2
    %v884 = vadd.f32 %v882, %v883
    %v885 = vrot.slane %v884, 1
    %v886 = vadd.f32 %v884, %v885
    %s887 = vtos %v886
    %v888 = vstv %s887
    %v889 = vmul.f32 %v888, 0.125
    %v890 = vmul.f32 %v823, %v847
    %v891 = vmul.f32 %v835, %v859
    %v892 = vsub.f32 %v890, %v891
    %v893 = vsub.f32 %v874, %v892
    %v894 = vmul.f32 %v823, %v859
    %v895 = vmul.f32 %v835, %v847
    %v896 = vadd.f32 %v894, %v895
    %v897 = vsub.f32 %v889, %v896
    %v898 = vmul.f32 %v893, %v893
    %v899 = vmul.f32 %v897, %v897
    %v900 = vadd.f32 %v898, %v899
    %v901 = vrsqrt.pop %v900
    %v902 = vmul.f32 %v900, %v901
    %vm903 = vcmp.eq.f32.partialorder %v900, inf
    %v904 = vsel %vm903, %v900, %v902
    %vm905 = vcmp.eq.f32.partialorder %v900, 0.0
    %v906 = vand.u32 %v900, 2147483648
    %v907 = vsel %vm905, %v906, %v904
    %vm908 = vcmask 0
    %909 = vst.msk [vmem:[#allocation16] sm:$0x1] %vm908, %v907
    // Predicated region
    $region66: #{tpu_custom_call.1} parent=1 // pred_check
      _
    $region67: #{tpu_custom_call.1} parent=1 // pred_check_branch
      %911 = sbr.rel (0) target = $region69
    $region68: #{tpu_custom_call.1} parent=1 // pred_region
      %s913 = ssub.s32 16, 16
      %914 = vsyncadd [#allocation4], %s913
      %s916 = sshll.u32 [#allocation16], 4
      %s917 = int_to_ptr.vmem [resolvable:$true] %s916
      %919 = dma.vmem_to_hbm [thread:$0]  %s917, 16, %s8, [#allocation4]
    $region69: #{tpu_custom_call.1} parent=1 // pred_fallthru
      _
    // Predicated region
    $region70: #{tpu_custom_call.1} parent=1 // pred_check
      _
    $region71: #{tpu_custom_call.1} parent=1 // pred_check_branch
      %921 = sbr.rel (0) target = $region73
    $region72: #{tpu_custom_call.1} parent=1 // pred_region
      %922 = dma.done [#allocation4], 16
    $region73: #{tpu_custom_call.1} parent=1 // pred_fallthru
      _
    %923 = vsyncpa [#allocation3], 1
    %924 = vsyncpa [#allocation6], 1
    %925 = vsyncpa [#allocation9], 1
    %926 = vsyncpa [#allocation12], 1
    %927 = vsyncpa [#allocation15], 1
    %928 = vsyncpa [#allocation4], 1

</llo_original>
